<compile_context>
chip_gen: v7x
topology: tpu7x:2x2x1
jax: 0.10.0
libtpu: 0.0.40
codegen_flags: <defaults>
</compile_context>

<pallas_src>
import functools

import jax
import jax.numpy as jnp
from jax.experimental import pallas as pl
from jax.experimental.pallas import tpu as pltpu

NEG_SLOPE = 0.01  # nn.LeakyReLU default negative_slope


def _leaky(y):
    return jnp.where(y > 0, y, NEG_SLOPE * y)


def _round_up(v, m):
    return ((v + m - 1) // m) * m


# ---------------- Pallas kernels ----------------

def _resblock_kernel_fused(x_ref, w1_ref, b1_ref, w2_ref, b2_ref, o_ref):
    """Fused ResidualBlock on one (tm, dim) row tile; both weights resident."""
    x = x_ref[...]
    # Linear1 + LeakyReLU. Explicit cast to the weight dtype so bf16 weights
    # always drive the bf16 MXU path; accumulate in f32.
    h = jnp.dot(x.astype(w1_ref.dtype), w1_ref[...],
                preferred_element_type=jnp.float32)
    h = _leaky(h + b1_ref[...])
    # (Dropout is identity in eval mode.)
    # Linear2, f32 accumulation.
    h = jnp.dot(h.astype(w2_ref.dtype), w2_ref[...],
                preferred_element_type=jnp.float32)
    h = h + b2_ref[...]
    # activation(block(x)) + x : residual add in f32, single final cast.
    o_ref[...] = (_leaky(h) + x.astype(jnp.float32)).astype(o_ref.dtype)


def _resblock_kernel_coltiled(x_ref, xcol_ref, w1_ref, b1_ref, w2_ref, b2_ref,
                              o_ref, h_ref):
    """Column-tiled ResidualBlock: w1 resident, w2/out tiled over columns.

    Grid = (row tiles i [parallel], output-column tiles j [arbitrary]).
    h = LeakyReLU(x @ w1 + b1) is computed once per row tile (j == 0) into the
    f32 VMEM scratch h_ref, then each j step computes one output column tile.
    """
    @pl.when(pl.program_id(1) == 0)
    def _():
        h = jnp.dot(x_ref[...].astype(w1_ref.dtype), w1_ref[...],
                    preferred_element_type=jnp.float32)
        h_ref[...] = _leaky(h + b1_ref[...])

    y = jnp.dot(h_ref[...].astype(w2_ref.dtype), w2_ref[...],
                preferred_element_type=jnp.float32)
    y = _leaky(y + b2_ref[...])
    o_ref[...] = (y + xcol_ref[...].astype(jnp.float32)).astype(o_ref.dtype)


# ---------------- hardware / feature helpers ----------------

@functools.lru_cache(maxsize=None)
def _vmem_capacity_bytes():
    try:
        return int(pltpu.get_tpu_info().vmem_capacity_bytes)
    except Exception:
        return 64 * 1024 * 1024  # conservative default (v7x per-TC VMEM)


@functools.lru_cache(maxsize=None)
def _default_row_tile():
    # v5e's 4x128^2 MXU saturates at M=128 and has less scoped-VMEM headroom;
    # v6e/v7x (2x256 MXU) prefer 256-row tiles.
    try:
        kind = jax.devices()[0].device_kind.lower()
    except Exception:
        return 256
    if "v5 lite" in kind or "v5lite" in kind or "v5e" in kind:
        return 128
    return 256


_BUFFERED1_OK = None


def _buffered1_supported():
    """Feature-detect pipeline_mode=pl.Buffered(1) once with a tiny probe."""
    global _BUFFERED1_OK
    if _BUFFERED1_OK is not None:
        return _BUFFERED1_OK
    try:
        def _probe(x_ref, o_ref):
            o_ref[...] = x_ref[...] + 1.0

        fn = pl.pallas_call(
            _probe,
            out_shape=jax.ShapeDtypeStruct((8, 128), jnp.float32),
            grid_spec=pltpu.PrefetchScalarGridSpec(
                num_scalar_prefetch=0,
                grid=(1,),
                in_specs=[pl.BlockSpec((8, 128), lambda i: (0, 0),
                                       pipeline_mode=pl.Buffered(1))],
                out_specs=pl.BlockSpec((8, 128), lambda i: (i, 0)),
            ),
        )
        jax.block_until_ready(fn(jnp.zeros((8, 128), jnp.float32)))
        _BUFFERED1_OK = True
    except Exception:
        _BUFFERED1_OK = False
    return _BUFFERED1_OK


def _const_spec(shape, grid_rank):
    """BlockSpec for a block whose index never changes (weights / biases).

    Single-buffered when this JAX build supports Buffered(1): the block is
    DMA'd once, so a second pipeline buffer is pure wasted VMEM.
    """
    ndim = len(shape)
    if grid_rank == 1:
        index_map = lambda i: (0,) * ndim
    else:
        index_map = lambda i, j: (0,) * ndim
    if _buffered1_supported():
        return pl.BlockSpec(shape, index_map, pipeline_mode=pl.Buffered(1))
    return pl.BlockSpec(shape, index_map)


def _pick_row_tile(n_rows, tm):
    if n_rows <= 128:
        return n_rows                      # one full-row block, single step
    if n_rows <= 2 * tm:
        # At least two row tiles so the "parallel" axis can use both of
        # v7x's TensorCores (neutral on single-TC v5e/v6e).
        half = -(-n_rows // 2)
        return max(_round_up(half, 8), 128)
    return tm


def _col_tile_candidates(dim):
    return [t for t in range(128, min(dim, 1024) + 1, 128) if dim % t == 0]


# ---------------- pallas_call wrapper ----------------

def residual_block_pallas(x, w1, b1, w2, b2, *, tm=None, col_tile=None):
    """ResidualBlock forward.

    x: (..., dim). w1, w2: (dim, dim) laid out for y = x @ W + b (i.e. the
    transpose of torch's nn.Linear.weight). b1, b2: (dim,) or (1, dim).
    For best MXU throughput / half the weight DMA bytes, pass x/w1/w2 in bf16
    (the kernel still accumulates and does the residual in f32).
    tm: row-tile override. col_tile: force the column-tiled large-dim path.
    """
    orig_shape = x.shape
    dim = orig_shape[-1]
    n_rows = 1
    for s in orig_shape[:-1]:
        n_rows *= s
    x2 = x.reshape(n_rows, dim)
    b1r = b1.reshape(1, dim)
    b2r = b2.reshape(1, dim)

    if tm is None:
        tm = _default_row_tile()
    tm_eff = _pick_row_tile(n_rows, tm)
    n_row_tiles = pl.cdiv(n_rows, tm_eff)

    w1b = jnp.dtype(w1.dtype).itemsize
    w2b = jnp.dtype(w2.dtype).itemsize
    xb = jnp.dtype(x.dtype).itemsize
    ob = xb
    b1b = jnp.dtype(b1r.dtype).itemsize
    b2b = jnp.dtype(b2r.dtype).itemsize

    cap = _vmem_capacity_bytes()
    budget = cap - (2 << 20)      # headroom for compiler-internal scratch
    margin = 1 << 20

    need_fused = (dim * dim * (w1b + w2b)        # resident weights (1-buffered)
                  + 2 * dim * (b1b + b2b)        # biases
                  + 2 * tm_eff * dim * xb        # x tile, double-buffered
                  + 2 * tm_eff * dim * ob        # out tile, double-buffered
                  + tm_eff * dim * 4             # f32 intermediate h
                  + margin)

    use_col = (col_tile is not None) or (need_fused > budget and dim % 128 == 0)

    cost = pl.CostEstimate(
        flops=4 * n_rows * dim * dim,
        transcendentals=0,
        bytes_accessed=(dim * dim * (w1b + w2b) + dim * (b1b + b2b)
                        + n_rows * dim * (xb + ob)),
    )

    if not use_col:
        # TODO(synk): if dim is not a multiple of 128 AND the full weights do
        # not fit VMEM, a K-axis accumulator tiling would be needed here.
        vmem_limit = int(min(cap, max(need_fused, 32 << 20)))
        out = pl.pallas_call(
            _resblock_kernel_fused,
            out_shape=jax.ShapeDtypeStruct((n_rows, dim), x.dtype),
            grid_spec=pltpu.PrefetchScalarGridSpec(
                num_scalar_prefetch=0,
                grid=(n_row_tiles,),
                in_specs=[
                    pl.BlockSpec((tm_eff, dim), lambda i: (i, 0)),  # x rows
                    _const_spec((dim, dim), 1),                     # w1
                    _const_spec((1, dim), 1),                       # b1
                    _const_spec((dim, dim), 1),                     # w2
                    _const_spec((1, dim), 1),                       # b2
                ],
                out_specs=pl.BlockSpec((tm_eff, dim), lambda i: (i, 0)),
            ),
            compiler_params=pltpu.CompilerParams(
                dimension_semantics=("parallel",),
                vmem_limit_bytes=vmem_limit,
            ),
            cost_estimate=cost,
        )(x2, w1, b1r, w2, b2r)
        return out.reshape(orig_shape)

    # ---------------- column-tiled path (large dim / v7x) ----------------
    fixed = (dim * dim * w1b                      # resident w1
             + 2 * dim * b1b                      # b1
             + 2 * tm_eff * dim * xb              # full-row x block (2-buffered)
             + tm_eff * dim * 4                   # f32 h scratch
             + margin)
    if col_tile is not None:
        tn = int(col_tile)
    else:
        cands = _col_tile_candidates(dim)
        tn = None
        for cand in reversed(cands):
            need = (fixed + 2 * dim * cand * w2b
                    + 2 * tm_eff * cand * (xb + ob) + 2 * cand * b2b)
            if need <= budget:
                tn = cand
                break
        if tn is None:
            # TODO(synk): if even tn=128 does not fit (huge dim), also tile w1
            # along its input rows with a K grid axis + f32 accumulator.
            tn = cands[0]
    if dim % tn != 0:
        raise ValueError(f"col_tile={tn} must divide dim={dim}")

    need_col = (fixed + 2 * dim * tn * w2b
                + 2 * tm_eff * tn * (xb + ob) + 2 * tn * b2b)
    vmem_limit = int(min(cap, max(need_col, 32 << 20)))

    out = pl.pallas_call(
        _resblock_kernel_coltiled,
        out_shape=jax.ShapeDtypeStruct((n_rows, dim), x.dtype),
        grid_spec=pltpu.PrefetchScalarGridSpec(
            num_scalar_prefetch=0,
            grid=(n_row_tiles, dim // tn),
            in_specs=[
                pl.BlockSpec((tm_eff, dim), lambda i, j: (i, 0)),   # x (matmul)
                pl.BlockSpec((tm_eff, tn), lambda i, j: (i, j)),    # x (residual cols)
                _const_spec((dim, dim), 2),                         # w1 (resident)
                _const_spec((1, dim), 2),                           # b1
                pl.BlockSpec((dim, tn), lambda i, j: (0, j)),       # w2 column tile
                pl.BlockSpec((1, tn), lambda i, j: (0, j)),         # b2 column tile
            ],
            out_specs=pl.BlockSpec((tm_eff, tn), lambda i, j: (i, j)),
            scratch_shapes=[pltpu.VMEM((tm_eff, dim), jnp.float32)],
        ),
        compiler_params=pltpu.CompilerParams(
            dimension_semantics=("parallel", "arbitrary"),
            vmem_limit_bytes=vmem_limit,
        ),
        cost_estimate=cost,
    )(x2, x2, w1, b1r, w2, b2r)
    return out.reshape(orig_shape)


# ---------------- pure-JAX reference ----------------

def residual_block_reference(x, w1, b1, w2, b2):
    xf = x.astype(jnp.float32)
    h = _leaky(xf @ w1.astype(jnp.float32) + b1.reshape(1, -1).astype(jnp.float32))
    h = h @ w2.astype(jnp.float32) + b2.reshape(1, -1).astype(jnp.float32)
    return (_leaky(h) + xf).astype(x.dtype)


# ---------------- test ----------------

if __name__ == "__main__":
    key = jax.random.PRNGKey(0)
    (k1, k2, k3, k4, kx, kxl, kxm,
     kw5, kw6, kb5, kb6, kxc) = jax.random.split(key, 12)

    dim = 128
    scale = 0.05
    w1 = scale * jax.random.normal(k1, (dim, dim), jnp.float32)
    b1 = scale * jax.random.normal(k2, (1, dim), jnp.float32)
    w2 = scale * jax.random.normal(k3, (dim, dim), jnp.float32)
    b2 = scale * jax.random.normal(k4, (1, dim), jnp.float32)

    # 1) f32, tiny batch (2, 4, 128) -> single fused grid step.
    x = jax.random.normal(kx, (2, 4, dim), jnp.float32)
    out = jax.block_until_ready(residual_block_pallas(x, w1, b1, w2, b2))
    ref = residual_block_reference(x, w1, b1, w2, b2)
    assert out.shape == x.shape, out.shape
    assert jnp.allclose(out, ref, atol=1e-5, rtol=1e-5), \
        float(jnp.max(jnp.abs(out - ref)))

    # 2) f32, 768 rows -> several parallel row tiles.
    xl = jax.random.normal(kxl, (16, 48, dim), jnp.float32)
    outl = jax.block_until_ready(residual_block_pallas(xl, w1, b1, w2, b2))
    refl = residual_block_reference(xl, w1, b1, w2, b2)
    assert jnp.allclose(outl, refl, atol=1e-5, rtol=1e-5), \
        float(jnp.max(jnp.abs(outl - refl)))

    # 3) f32, 200 rows -> split into 2 row tiles (ragged last tile).
    xm = jax.random.normal(kxm, (8, 25, dim), jnp.float32)
    outm = jax.block_until_ready(residual_block_pallas(xm, w1, b1, w2, b2))
    refm = residual_block_reference(xm, w1, b1, w2, b2)
    assert jnp.allclose(outm, refm, atol=1e-5, rtol=1e-5), \
        float(jnp.max(jnp.abs(outm - refm)))

    # 4) bf16 weights + activations (f32 accumulation / residual in-kernel).
    out_bf = jax.block_until_ready(residual_block_pallas(
        x.astype(jnp.bfloat16), w1.astype(jnp.bfloat16), b1,
        w2.astype(jnp.bfloat16), b2))
    assert out_bf.dtype == jnp.bfloat16
    assert jnp.allclose(out_bf.astype(jnp.float32), ref, atol=5e-2, rtol=5e-2), \
        float(jnp.max(jnp.abs(out_bf.astype(jnp.float32) - ref)))

    # 5) column-tiled path (forced), dim=256 -> 2 output-column grid steps.
    dim2 = 256
    w1c = scale * jax.random.normal(kw5, (dim2, dim2), jnp.float32)
    w2c = scale * jax.random.normal(kw6, (dim2, dim2), jnp.float32)
    b1c = scale * jax.random.normal(kb5, (1, dim2), jnp.float32)
    b2c = scale * jax.random.normal(kb6, (1, dim2), jnp.float32)
    xc = jax.random.normal(kxc, (2, 4, dim2), jnp.float32)
    outc = jax.block_until_ready(residual_block_pallas(
        xc, w1c, b1c, w2c, b2c, col_tile=128))
    refc = residual_block_reference(xc, w1c, b1c, w2c, b2c)
    assert jnp.allclose(outc, refc, atol=1e-5, rtol=1e-5), \
        float(jnp.max(jnp.abs(outc - refc)))

    print("KERNEL_OK")
</pallas_src>

<mosaic_0001>
module attributes {stable_mosaic.version = 11 : i64} {
  func.func @_probe(%arg0: i32, %arg1: memref<8x128xf32, #tpu.memory_space<vmem>>, %arg2: memref<8x128xf32, #tpu.memory_space<vmem>>) attributes {dimension_semantics = [#tpu.dimension_semantics<arbitrary>], iteration_bounds = array<i64: 1>, scalar_prefetch = 0 : i64, scratch_operands = 0 : i64, tpu.core_type = #tpu.core_type<tc>, window_params = [{pipeline_mode = #tpu.pipeline_mode<synchronous>, transform_indices = @transform_0, window_bounds = array<i64: 8, 128>}, {transform_indices = @transform_1, window_bounds = array<i64: 8, 128>}]} {
    %c0 = arith.constant 0 : index
    %c0_0 = arith.constant 0 : index
    %0 = vector.load %arg1[%c0, %c0_0] : memref<8x128xf32, #tpu.memory_space<vmem>>, vector<8x128xf32>
    %cst = arith.constant 1.000000e+00 : f32
    %1 = vector.broadcast %cst : f32 to vector<8x128xf32>
    %2 = arith.addf %0, %1 : vector<8x128xf32>
    %c0_1 = arith.constant 0 : index
    %c0_2 = arith.constant 0 : index
    %3 = vector.load %arg2[%c0_1, %c0_2] : memref<8x128xf32, #tpu.memory_space<vmem>>, vector<8x128xf32>
    tpu.vector_store %arg2[%c0_1, %c0_2], %2 {strides = array<i32>} : memref<8x128xf32, #tpu.memory_space<vmem>>, vector<8x128xf32>,
    return
  }
  func.func @transform_0(%arg0: i32) -> (i32, i32) {
    %c0_i32 = arith.constant 0 : i32
    %c0_i32_0 = arith.constant 0 : i32
    %c0_i32_1 = arith.constant 0 : i32
    return %c0_i32, %c0_i32_0 : i32, i32
  }
  func.func @transform_1(%arg0: i32) -> (i32, i32) {
    %c0_i32 = arith.constant 0 : i32
    %c0_i32_0 = arith.constant 0 : i32
    return %arg0, %c0_i32 : i32, i32
  }
}

module attributes {stable_mosaic.version = 11 : i64} {
  func.func @_resblock_kernel_fused(%arg0: i32, %arg1: memref<8x128xf32, #tpu.memory_space<vmem>>, %arg2: memref<128x128xf32, #tpu.memory_space<vmem>>, %arg3: memref<1x128xf32, #tpu.memory_space<vmem>>, %arg4: memref<128x128xf32, #tpu.memory_space<vmem>>, %arg5: memref<1x128xf32, #tpu.memory_space<vmem>>, %arg6: memref<8x128xf32, #tpu.memory_space<vmem>>) attributes {dimension_semantics = [#tpu.dimension_semantics<parallel>], iteration_bounds = array<i64: 1>, scalar_prefetch = 0 : i64, scratch_operands = 0 : i64, tpu.core_type = #tpu.core_type<tc>, window_params = [{transform_indices = @transform_0, window_bounds = array<i64: 8, 128>}, {pipeline_mode = #tpu.pipeline_mode<synchronous>, transform_indices = @transform_1, window_bounds = array<i64: 128, 128>}, {pipeline_mode = #tpu.pipeline_mode<synchronous>, transform_indices = @transform_2, window_bounds = array<i64: 1, 128>}, {pipeline_mode = #tpu.pipeline_mode<synchronous>, transform_indices = @transform_3, window_bounds = array<i64: 128, 128>}, {pipeline_mode = #tpu.pipeline_mode<synchronous>, transform_indices = @transform_4, window_bounds = array<i64: 1, 128>}, {transform_indices = @transform_5, window_bounds = array<i64: 8, 128>}]} {
    %c0 = arith.constant 0 : index
    %c0_0 = arith.constant 0 : index
    %0 = vector.load %arg1[%c0, %c0_0] : memref<8x128xf32, #tpu.memory_space<vmem>>, vector<8x128xf32>
    %c0_1 = arith.constant 0 : index
    %c0_2 = arith.constant 0 : index
    %1 = vector.load %arg2[%c0_1, %c0_2] : memref<128x128xf32, #tpu.memory_space<vmem>>, vector<128x128xf32>
    %cst = arith.constant dense<0.000000e+00> : vector<8x128xf32>
    %2 = tpu.matmul %0, %1, %cst {dimension_numbers = #tpu.dot_dimension_numbers<[1], [0], [0], [1], [0, 0, 1, 1], [], []>} : vector<8x128xf32>, vector<128x128xf32>, vector<8x128xf32> -> vector<8x128xf32>
    %c0_3 = arith.constant 0 : index
    %c0_4 = arith.constant 0 : index
    %3 = vector.load %arg3[%c0_3, %c0_4] : memref<1x128xf32, #tpu.memory_space<vmem>>, vector<1x128xf32>
    %4 = vector.broadcast %3 : vector<1x128xf32> to vector<8x128xf32>
    %5 = arith.addf %2, %4 : vector<8x128xf32>
    %cst_5 = arith.constant 0.000000e+00 : f32
    %6 = vector.broadcast %cst_5 : f32 to vector<8x128xf32>
    %7 = arith.cmpf ogt, %5, %6 : vector<8x128xf32>
    %cst_6 = arith.constant 0.00999999977 : f32
    %8 = vector.broadcast %cst_6 : f32 to vector<8x128xf32>
    %9 = arith.mulf %8, %5 : vector<8x128xf32>
    %10 = arith.select %7, %5, %9 : vector<8x128xi1>, vector<8x128xf32>
    %c0_7 = arith.constant 0 : index
    %c0_8 = arith.constant 0 : index
    %11 = vector.load %arg4[%c0_7, %c0_8] : memref<128x128xf32, #tpu.memory_space<vmem>>, vector<128x128xf32>
    %cst_9 = arith.constant dense<0.000000e+00> : vector<8x128xf32>
    %12 = tpu.matmul %10, %11, %cst_9 {dimension_numbers = #tpu.dot_dimension_numbers<[1], [0], [0], [1], [0, 0, 1, 1], [], []>} : vector<8x128xf32>, vector<128x128xf32>, vector<8x128xf32> -> vector<8x128xf32>
    %c0_10 = arith.constant 0 : index
    %c0_11 = arith.constant 0 : index
    %13 = vector.load %arg5[%c0_10, %c0_11] : memref<1x128xf32, #tpu.memory_space<vmem>>, vector<1x128xf32>
    %14 = vector.broadcast %13 : vector<1x128xf32> to vector<8x128xf32>
    %15 = arith.addf %12, %14 : vector<8x128xf32>
    %cst_12 = arith.constant 0.000000e+00 : f32
    %16 = vector.broadcast %cst_12 : f32 to vector<8x128xf32>
    %17 = arith.cmpf ogt, %15, %16 : vector<8x128xf32>
    %cst_13 = arith.constant 0.00999999977 : f32
    %18 = vector.broadcast %cst_13 : f32 to vector<8x128xf32>
    %19 = arith.mulf %18, %15 : vector<8x128xf32>
    %20 = arith.select %17, %15, %19 : vector<8x128xi1>, vector<8x128xf32>
    %21 = arith.addf %20, %0 : vector<8x128xf32>
    %c0_14 = arith.constant 0 : index
    %c0_15 = arith.constant 0 : index
    %22 = vector.load %arg6[%c0_14, %c0_15] : memref<8x128xf32, #tpu.memory_space<vmem>>, vector<8x128xf32>
    tpu.vector_store %arg6[%c0_14, %c0_15], %21 {strides = array<i32>} : memref<8x128xf32, #tpu.memory_space<vmem>>, vector<8x128xf32>,
    return
  }
  func.func @transform_0(%arg0: i32) -> (i32, i32) {
    %c0_i32 = arith.constant 0 : i32
    %c0_i32_0 = arith.constant 0 : i32
    return %arg0, %c0_i32 : i32, i32
  }
  func.func @transform_1(%arg0: i32) -> (i32, i32) {
    %c0_i32 = arith.constant 0 : i32
    %c0_i32_0 = arith.constant 0 : i32
    %c0_i32_1 = arith.constant 0 : i32
    return %c0_i32, %c0_i32_0 : i32, i32
  }
  func.func @transform_2(%arg0: i32) -> (i32, i32) {
    %c0_i32 = arith.constant 0 : i32
    %c0_i32_0 = arith.constant 0 : i32
    %c0_i32_1 = arith.constant 0 : i32
    return %c0_i32, %c0_i32_0 : i32, i32
  }
  func.func @transform_3(%arg0: i32) -> (i32, i32) {
    %c0_i32 = arith.constant 0 : i32
    %c0_i32_0 = arith.constant 0 : i32
    %c0_i32_1 = arith.constant 0 : i32
    return %c0_i32, %c0_i32_0 : i32, i32
  }
  func.func @transform_4(%arg0: i32) -> (i32, i32) {
    %c0_i32 = arith.constant 0 : i32
    %c0_i32_0 = arith.constant 0 : i32
    %c0_i32_1 = arith.constant 0 : i32
    return %c0_i32, %c0_i32_0 : i32, i32
  }
  func.func @transform_5(%arg0: i32) -> (i32, i32) {
    %c0_i32 = arith.constant 0 : i32
    %c0_i32_0 = arith.constant 0 : i32
    return %arg0, %c0_i32 : i32, i32
  }
}

</mosaic_0001>

<llo_original>
// kernel: tpu_custom_call.1
$region0: #{tpu_custom_call.1}
  #allocation0 [shape = 'u32[]', space=smem, size = 0x4, offset = 0x4, fixed_abs, tag = 'smem constant byte address 0x4 - core index']
  #allocation1 [shape = 'u32[144,128]{1,0:T(1,128)}', space=vmem, size = 0x12000, scoped, tag = 'internal scratch']
  %s0 = inlined_call_operand.hbm [shape: f32[8,128], index: 0, kind: input, shape index: {}]
  %s1 = inlined_call_operand.hbm [shape: f32[8,128], index: 1, kind: output, shape index: {}]
  %s2 = sld [smem:[#allocation0]]
  $region18: #{tpu_custom_call.1} parent=0
    _
  %s4 = ssub.s32 1, %s2
  %s5 = scalar_select 0, %s4, %s2
  $region1: #{tpu_custom_call.1} parent=0
    #allocation2 [shape = 'u8[4096]{0}', space=vmem, size = 0x1000, scoped, tag = 'input window, operand 0, single buffered']
    #allocation3 [shape = 's32[1]{0}', space=sflag, size = 0x4, scoped, tag = 'scoped memory for tpu_custom_call.1']
    #allocation4 [shape = 's32[1]{0}', space=sflag, size = 0x4, scoped, tag = 'scoped memory for tpu_custom_call.1']
    #allocation5 [shape = 'u8[4096]{0}', space=vmem, size = 0x1000, scoped, tag = 'output window, operand 0, single buffered']
    %6 = vsyncpa [#allocation3], 0
    %7 = vsyncpa [#allocation4], 0
    // Predicated region
    $region2: #{tpu_custom_call.1} parent=1 // pred_check
      _
    $region3: #{tpu_custom_call.1} parent=1 // pred_check_branch
      %9 = sbr.rel (0) target = $region5
    $region4: #{tpu_custom_call.1} parent=1 // pred_region
      %s11 = ssub.s32 128, 128
      %12 = vsyncadd [#allocation3], %s11
      %s14 = sshll.u32 [#allocation2], 4
      %s15 = int_to_ptr.vmem [resolvable:$true] %s14
      %17 = dma.hbm_to_vmem [thread:$0]  %s0, 128, %s15, [#allocation3]
    $region5: #{tpu_custom_call.1} parent=1 // pred_fallthru
      _
    // Predicated region
    $region6: #{tpu_custom_call.1} parent=1 // pred_check
      _
    $region7: #{tpu_custom_call.1} parent=1 // pred_check_branch
      %19 = sbr.rel (0) target = $region9
    $region8: #{tpu_custom_call.1} parent=1 // pred_region
      %20 = dma.done [#allocation3], 128
    $region9: #{tpu_custom_call.1} parent=1 // pred_fallthru
      _
    %v21 = vld [vmem:[#allocation2] sm:$0xff]
    %v22 = vadd.f32 %v21, 1.0
    %23 = vst [vmem:[#allocation5] sm:$0xff] %v22
    // Predicated region
    $region10: #{tpu_custom_call.1} parent=1 // pred_check
      _
    $region11: #{tpu_custom_call.1} parent=1 // pred_check_branch
      %25 = sbr.rel (0) target = $region13
    $region12: #{tpu_custom_call.1} parent=1 // pred_region
      %s27 = ssub.s32 128, 128
      %28 = vsyncadd [#allocation4], %s27
      %s30 = sshll.u32 [#allocation5], 4
      %s31 = int_to_ptr.vmem [resolvable:$true] %s30
      %33 = dma.vmem_to_hbm [thread:$0]  %s31, 128, %s1, [#allocation4]
    $region13: #{tpu_custom_call.1} parent=1 // pred_fallthru
      _
    // Predicated region
    $region14: #{tpu_custom_call.1} parent=1 // pred_check
      _
    $region15: #{tpu_custom_call.1} parent=1 // pred_check_branch
      %35 = sbr.rel (0) target = $region17
    $region16: #{tpu_custom_call.1} parent=1 // pred_region
      %36 = dma.done [#allocation4], 128
    $region17: #{tpu_custom_call.1} parent=1 // pred_fallthru
      _
    %37 = vsyncpa [#allocation3], 1
    %38 = vsyncpa [#allocation4], 1

// kernel: tpu_custom_call.1
$region0: #{tpu_custom_call.1}
  #allocation0 [shape = 'u32[]', space=smem, size = 0x4, offset = 0x4, fixed_abs, tag = 'smem constant byte address 0x4 - core index']
  #allocation1 [shape = 'u32[144,128]{1,0:T(1,128)}', space=vmem, size = 0x12000, scoped, tag = 'internal scratch']
  %s0 = inlined_call_operand.hbm [shape: f32[8,128], index: 0, kind: input, shape index: {}]
  %s1 = inlined_call_operand.hbm [shape: f32[128,128], index: 1, kind: input, shape index: {}]
  %s2 = inlined_call_operand.vmem [shape: f32[1,128], index: 2, kind: input, shape index: {}]
  %s3 = inlined_call_operand.hbm [shape: f32[128,128], index: 3, kind: input, shape index: {}]
  %s4 = inlined_call_operand.vmem [shape: f32[1,128], index: 4, kind: input, shape index: {}]
  %s5 = inlined_call_operand.hbm [shape: f32[8,128], index: 5, kind: output, shape index: {}]
  %s6 = sld [smem:[#allocation0]]
  $region42: #{tpu_custom_call.1} parent=0
    _
  %s8 = ssub.s32 1, %s6
  %s9 = scalar_select 0, %s8, %s6
  $region1: #{tpu_custom_call.1} parent=0
    #allocation2 [shape = 'u8[4096]{0}', space=vmem, size = 0x1000, scoped, tag = 'input window, operand 0, single buffered']
    #allocation3 [shape = 's32[1]{0}', space=sflag, size = 0x4, scoped, tag = 'scoped memory for tpu_custom_call.1']
    #allocation4 [shape = 's32[1]{0}', space=sflag, size = 0x4, scoped, tag = 'scoped memory for tpu_custom_call.1']
    #allocation5 [shape = 'u8[65536]{0}', space=vmem, size = 0x10000, scoped, tag = 'input window, operand 1, single buffered']
    #allocation6 [shape = 's32[1]{0}', space=sflag, size = 0x4, scoped, tag = 'scoped memory for tpu_custom_call.1']
    #allocation7 [shape = 'u8[65536]{0}', space=vmem, size = 0x10000, scoped, tag = 'input window, operand 3, single buffered']
    #allocation8 [shape = 'u8[4096]{0}', space=vmem, size = 0x1000, scoped, tag = 'output window, operand 0, single buffered']
    %10 = vsyncpa [#allocation3], 0
    %11 = vsyncpa [#allocation6], 0
    %12 = vsyncpa [#allocation4], 0
    // Predicated region
    $region2: #{tpu_custom_call.1} parent=1 // pred_check
      _
    $region3: #{tpu_custom_call.1} parent=1 // pred_check_branch
      %14 = sbr.rel (0) target = $region5
    $region4: #{tpu_custom_call.1} parent=1 // pred_region
      %s16 = ssub.s32 128, 128
      %17 = vsyncadd [#allocation3], %s16
      %s19 = sshll.u32 [#allocation2], 4
      %s20 = int_to_ptr.vmem [resolvable:$true] %s19
      %22 = dma.hbm_to_vmem [thread:$0]  %s0, 128, %s20, [#allocation3]
    $region5: #{tpu_custom_call.1} parent=1 // pred_fallthru
      _
    // Predicated region
    $region6: #{tpu_custom_call.1} parent=1 // pred_check
      _
    $region7: #{tpu_custom_call.1} parent=1 // pred_check_branch
      %24 = sbr.rel (0) target = $region9
    $region8: #{tpu_custom_call.1} parent=1 // pred_region
      %s26 = ssub.s32 2048, 2048
      %27 = vsyncadd [#allocation6], %s26
      %s28 = sshll.u32 [#allocation5], 4
      %s29 = int_to_ptr.vmem [resolvable:$true] %s28
      %34 = dma.hbm_to_vmem [thread:$0]  %s1, 2048, %s29, [#allocation6], 128, 128, 8
    $region9: #{tpu_custom_call.1} parent=1 // pred_fallthru
      _
    // Predicated region
    $region10: #{tpu_custom_call.1} parent=1 // pred_check
      _
    $region11: #{tpu_custom_call.1} parent=1 // pred_check_branch
      %36 = sbr.rel (0) target = $region13
    $region12: #{tpu_custom_call.1} parent=1 // pred_region
      _
    $region13: #{tpu_custom_call.1} parent=1 // pred_fallthru
      _
    // Predicated region
    $region14: #{tpu_custom_call.1} parent=1 // pred_check
      _
    $region15: #{tpu_custom_call.1} parent=1 // pred_check_branch
      %38 = sbr.rel (0) target = $region17
    $region16: #{tpu_custom_call.1} parent=1 // pred_region
      %s40 = ssub.s32 2048, 2048
      %41 = vsyncadd [#allocation6], %s40
      %s42 = sshll.u32 [#allocation7], 4
      %s43 = int_to_ptr.vmem [resolvable:$true] %s42
      %48 = dma.hbm_to_vmem [thread:$0]  %s3, 2048, %s43, [#allocation6], 128, 128, 8
    $region17: #{tpu_custom_call.1} parent=1 // pred_fallthru
      _
    // Predicated region
    $region18: #{tpu_custom_call.1} parent=1 // pred_check
      _
    $region19: #{tpu_custom_call.1} parent=1 // pred_check_branch
      %50 = sbr.rel (0) target = $region21
    $region20: #{tpu_custom_call.1} parent=1 // pred_region
      _
    $region21: #{tpu_custom_call.1} parent=1 // pred_fallthru
      _
    // Predicated region
    $region22: #{tpu_custom_call.1} parent=1 // pred_check
      _
    $region23: #{tpu_custom_call.1} parent=1 // pred_check_branch
      %52 = sbr.rel (0) target = $region25
    $region24: #{tpu_custom_call.1} parent=1 // pred_region
      %53 = dma.done [#allocation3], 128
    $region25: #{tpu_custom_call.1} parent=1 // pred_fallthru
      _
    // Predicated region
    $region26: #{tpu_custom_call.1} parent=1 // pred_check
      _
    $region27: #{tpu_custom_call.1} parent=1 // pred_check_branch
      %55 = sbr.rel (0) target = $region29
    $region28: #{tpu_custom_call.1} parent=1 // pred_region
      %56 = dma.done [#allocation6], 2048
    $region29: #{tpu_custom_call.1} parent=1 // pred_fallthru
      _
    // Predicated region
    $region30: #{tpu_custom_call.1} parent=1 // pred_check
      _
    $region31: #{tpu_custom_call.1} parent=1 // pred_check_branch
      %58 = sbr.rel (0) target = $region33
    $region32: #{tpu_custom_call.1} parent=1 // pred_region
      %59 = dma.done [#allocation6], 2048
    $region33: #{tpu_custom_call.1} parent=1 // pred_fallthru
      _
    %v60 = vld [vmem:[#allocation2] sm:$0xff]
    %v61 = vld [vmem:[#allocation5] sm:$0xff]
    %v62 = vld [vmem:[#allocation5 + $0x8] sm:$0xff]
    %v63 = vld [vmem:[#allocation5 + $0x10] sm:$0xff]
    %v64 = vld [vmem:[#allocation5 + $0x18] sm:$0xff]
    %v65 = vld [vmem:[#allocation5 + $0x20] sm:$0xff]
    %v66 = vld [vmem:[#allocation5 + $0x28] sm:$0xff]
    %v67 = vld [vmem:[#allocation5 + $0x30] sm:$0xff]
    %v68 = vld [vmem:[#allocation5 + $0x38] sm:$0xff]
    %v69 = vld [vmem:[#allocation5 + $0x40] sm:$0xff]
    %v70 = vld [vmem:[#allocation5 + $0x48] sm:$0xff]
    %v71 = vld [vmem:[#allocation5 + $0x50] sm:$0xff]
    %v72 = vld [vmem:[#allocation5 + $0x58] sm:$0xff]
    %v73 = vld [vmem:[#allocation5 + $0x60] sm:$0xff]
    %v74 = vld [vmem:[#allocation5 + $0x68] sm:$0xff]
    %v75 = vld [vmem:[#allocation5 + $0x70] sm:$0xff]
    %v76 = vld [vmem:[#allocation5 + $0x78] sm:$0xff]
    %v77 = vld [vmem:[%s2] sm:$0x1]
    %v79 = vlaneseq
    %v80 = vshrl.u32 %v79, 7
    %v81 = vsub.s32 0, %v80
    %v82 = vrot.slane %v77, %v81
    %84 = vmatprep.subr.mxu0 0.0
    %85 = vmatpush1.msra.mxu0 %v61
    %86 = vmatprep.subr.mxu0 0.0
    %87 = vmatpush1.msra.mxu0 %v62
    %88 = vmatprep.subr.mxu0 0.0
    %89 = vmatpush1.msra.mxu0 %v63
    %90 = vmatprep.subr.mxu0 0.0
    %91 = vmatpush1.msra.mxu0 %v64
    %92 = vmatprep.subr.mxu0 0.0
    %93 = vmatpush1.msra.mxu0 %v65
    %94 = vmatprep.subr.mxu0 0.0
    %95 = vmatpush1.msra.mxu0 %v66
    %96 = vmatprep.subr.mxu0 0.0
    %97 = vmatpush1.msra.mxu0 %v67
    %98 = vmatprep.subr.mxu0 0.0
    %99 = vmatpush1.msra.mxu0 %v68
    %100 = vmatprep.subr.mxu0 0.0
    %101 = vmatpush1.msra.mxu0 %v69
    %102 = vmatprep.subr.mxu0 0.0
    %103 = vmatpush1.msra.mxu0 %v70
    %104 = vmatprep.subr.mxu0 0.0
    %105 = vmatpush1.msra.mxu0 %v71
    %106 = vmatprep.subr.mxu0 0.0
    %107 = vmatpush1.msra.mxu0 %v72
    %108 = vmatprep.subr.mxu0 0.0
    %109 = vmatpush1.msra.mxu0 %v73
    %110 = vmatprep.subr.mxu0 0.0
    %111 = vmatpush1.msra.mxu0 %v74
    %112 = vmatprep.subr.mxu0 0.0
    %113 = vmatpush1.msra.mxu0 %v75
    %114 = vmatprep.subr.mxu0 0.0
    %115 = vmatpush1.msra.mxu0 %v76
    %116 = vmatprep.subr.mxu0 0.0
    %117 = vmatpush1.msra.mxu0 0.0
    %118 = vmatprep.subr.mxu0 0.0
    %119 = vmatpush1.msra.mxu0 0.0
    %120 = vmatprep.subr.mxu0 0.0
    %121 = vmatpush1.msra.mxu0 0.0
    %122 = vmatprep.subr.mxu0 0.0
    %123 = vmatpush1.msra.mxu0 0.0
    %124 = vmatprep.subr.mxu0 0.0
    %125 = vmatpush1.msra.mxu0 0.0
    %126 = vmatprep.subr.mxu0 0.0
    %127 = vmatpush1.msra.mxu0 0.0
    %128 = vmatprep.subr.mxu0 0.0
    %129 = vmatpush1.msra.mxu0 0.0
    %130 = vmatprep.subr.mxu0 0.0
    %131 = vmatpush1.msra.mxu0 0.0
    %132 = vmatprep.subr.mxu0 0.0
    %133 = vmatpush1.msra.mxu0 0.0
    %134 = vmatprep.subr.mxu0 0.0
    %135 = vmatpush1.msra.mxu0 0.0
    %136 = vmatprep.subr.mxu0 0.0
    %137 = vmatpush1.msra.mxu0 0.0
    %138 = vmatprep.subr.mxu0 0.0
    %139 = vmatpush1.msra.mxu0 0.0
    %140 = vmatprep.subr.mxu0 0.0
    %141 = vmatpush1.msra.mxu0 0.0
    %142 = vmatprep.subr.mxu0 0.0
    %143 = vmatpush1.msra.mxu0 0.0
    %144 = vmatprep.subr.mxu0 0.0
    %145 = vmatpush1.msra.mxu0 0.0
    %146 = vmatprep.subr.mxu0 0.0
    %147 = vmatpush1.msra.mxu0 0.0
    %148 = vmatprep.mubr.f32.mxu0 0.0
    %149 = vmatmul.mubr.f32.gmra.mrb[0].mxu0 %v60
    %v150 = vpop.f32.mrb[0].mxu0
    %v151 = vadd.f32 %v82, %v150
    %v152 = vpop.f32.mrb[0].mxu0
    %153 = vdwg.mxu0
    %vm154 = vcmp.gt.f32.partialorder %v151, 0.0
    %v155 = vmul.f32 %v151, 0.01
    %v156 = vsel %vm154, %v151, %v155
    %v157 = vld [vmem:[#allocation7] sm:$0xff]
    %v158 = vld [vmem:[#allocation7 + $0x8] sm:$0xff]
    %v159 = vld [vmem:[#allocation7 + $0x10] sm:$0xff]
    %v160 = vld [vmem:[#allocation7 + $0x18] sm:$0xff]
    %v161 = vld [vmem:[#allocation7 + $0x20] sm:$0xff]
    %v162 = vld [vmem:[#allocation7 + $0x28] sm:$0xff]
    %v163 = vld [vmem:[#allocation7 + $0x30] sm:$0xff]
    %v164 = vld [vmem:[#allocation7 + $0x38] sm:$0xff]
    %v165 = vld [vmem:[#allocation7 + $0x40] sm:$0xff]
    %v166 = vld [vmem:[#allocation7 + $0x48] sm:$0xff]
    %v167 = vld [vmem:[#allocation7 + $0x50] sm:$0xff]
    %v168 = vld [vmem:[#allocation7 + $0x58] sm:$0xff]
    %v169 = vld [vmem:[#allocation7 + $0x60] sm:$0xff]
    %v170 = vld [vmem:[#allocation7 + $0x68] sm:$0xff]
    %v171 = vld [vmem:[#allocation7 + $0x70] sm:$0xff]
    %v172 = vld [vmem:[#allocation7 + $0x78] sm:$0xff]
    %v173 = vld [vmem:[%s4] sm:$0x1]
    %v175 = vlaneseq
    %v176 = vshrl.u32 %v175, 7
    %v177 = vsub.s32 0, %v176
    %v178 = vrot.slane %v173, %v177
    %180 = vmatprep.subr.mxu0 0.0
    %181 = vmatpush1.msra.mxu0 %v157
    %182 = vmatprep.subr.mxu0 0.0
    %183 = vmatpush1.msra.mxu0 %v158
    %184 = vmatprep.subr.mxu0 0.0
    %185 = vmatpush1.msra.mxu0 %v159
    %186 = vmatprep.subr.mxu0 0.0
    %187 = vmatpush1.msra.mxu0 %v160
    %188 = vmatprep.subr.mxu0 0.0
    %189 = vmatpush1.msra.mxu0 %v161
    %190 = vmatprep.subr.mxu0 0.0
    %191 = vmatpush1.msra.mxu0 %v162
    %192 = vmatprep.subr.mxu0 0.0
    %193 = vmatpush1.msra.mxu0 %v163
    %194 = vmatprep.subr.mxu0 0.0
    %195 = vmatpush1.msra.mxu0 %v164
    %196 = vmatprep.subr.mxu0 0.0
    %197 = vmatpush1.msra.mxu0 %v165
    %198 = vmatprep.subr.mxu0 0.0
    %199 = vmatpush1.msra.mxu0 %v166
    %200 = vmatprep.subr.mxu0 0.0
    %201 = vmatpush1.msra.mxu0 %v167
    %202 = vmatprep.subr.mxu0 0.0
    %203 = vmatpush1.msra.mxu0 %v168
    %204 = vmatprep.subr.mxu0 0.0
    %205 = vmatpush1.msra.mxu0 %v169
    %206 = vmatprep.subr.mxu0 0.0
    %207 = vmatpush1.msra.mxu0 %v170
    %208 = vmatprep.subr.mxu0 0.0
    %209 = vmatpush1.msra.mxu0 %v171
    %210 = vmatprep.subr.mxu0 0.0
    %211 = vmatpush1.msra.mxu0 %v172
    %212 = vmatprep.subr.mxu0 0.0
    %213 = vmatpush1.msra.mxu0 0.0
    %214 = vmatprep.subr.mxu0 0.0
    %215 = vmatpush1.msra.mxu0 0.0
    %216 = vmatprep.subr.mxu0 0.0
    %217 = vmatpush1.msra.mxu0 0.0
    %218 = vmatprep.subr.mxu0 0.0
    %219 = vmatpush1.msra.mxu0 0.0
    %220 = vmatprep.subr.mxu0 0.0
    %221 = vmatpush1.msra.mxu0 0.0
    %222 = vmatprep.subr.mxu0 0.0
    %223 = vmatpush1.msra.mxu0 0.0
    %224 = vmatprep.subr.mxu0 0.0
    %225 = vmatpush1.msra.mxu0 0.0
    %226 = vmatprep.subr.mxu0 0.0
    %227 = vmatpush1.msra.mxu0 0.0
    %228 = vmatprep.subr.mxu0 0.0
    %229 = vmatpush1.msra.mxu0 0.0
    %230 = vmatprep.subr.mxu0 0.0
    %231 = vmatpush1.msra.mxu0 0.0
    %232 = vmatprep.subr.mxu0 0.0
    %233 = vmatpush1.msra.mxu0 0.0
    %234 = vmatprep.subr.mxu0 0.0
    %235 = vmatpush1.msra.mxu0 0.0
    %236 = vmatprep.subr.mxu0 0.0
    %237 = vmatpush1.msra.mxu0 0.0
    %238 = vmatprep.subr.mxu0 0.0
    %239 = vmatpush1.msra.mxu0 0.0
    %240 = vmatprep.subr.mxu0 0.0
    %241 = vmatpush1.msra.mxu0 0.0
    %242 = vmatprep.subr.mxu0 0.0
    %243 = vmatpush1.msra.mxu0 0.0
    %244 = vmatprep.mubr.f32.mxu0 0.0
    %245 = vmatmul.mubr.f32.gmra.mrb[0].mxu0 %v156
    %v246 = vpop.f32.mrb[0].mxu0
    %v247 = vadd.f32 %v178, %v246
    %v248 = vpop.f32.mrb[0].mxu0
    %249 = vdwg.mxu0
    %vm250 = vcmp.gt.f32.partialorder %v247, 0.0
    %v251 = vmul.f32 %v247, 0.01
    %v252 = vsel %vm250, %v247, %v251
    %v253 = vadd.f32 %v252, %v60
    %254 = vst [vmem:[#allocation8] sm:$0xff] %v253
    // Predicated region
    $region34: #{tpu_custom_call.1} parent=1 // pred_check
      _
    $region35: #{tpu_custom_call.1} parent=1 // pred_check_branch
      %256 = sbr.rel (0) target = $region37
    $region36: #{tpu_custom_call.1} parent=1 // pred_region
      %s258 = ssub.s32 128, 128
      %259 = vsyncadd [#allocation4], %s258
      %s261 = sshll.u32 [#allocation8], 4
      %s262 = int_to_ptr.vmem [resolvable:$true] %s261
      %264 = dma.vmem_to_hbm [thread:$0]  %s262, 128, %s5, [#allocation4]
    $region37: #{tpu_custom_call.1} parent=1 // pred_fallthru
      _
    // Predicated region
    $region38: #{tpu_custom_call.1} parent=1 // pred_check
      _
    $region39: #{tpu_custom_call.1} parent=1 // pred_check_branch
      %266 = sbr.rel (0) target = $region41
    $region40: #{tpu_custom_call.1} parent=1 // pred_region
      %267 = dma.done [#allocation4], 128
    $region41: #{tpu_custom_call.1} parent=1 // pred_fallthru
      _
    %268 = vsyncpa [#allocation3], 1
    %269 = vsyncpa [#allocation6], 1
    %270 = vsyncpa [#allocation4], 1

</llo_original>
